<compile_context>
chip_gen: v7x
topology: tpu7x:2x2x1
jax: 0.10.0
libtpu: 0.0.40
codegen_flags: <defaults>
</compile_context>

<pallas_src>
import math

import jax
import jax.numpy as jnp
from jax.experimental import pallas as pl
from jax.experimental.pallas import tpu as pltpu


def _linear_lane_dense_kernel(w_ref, b_ref, x_ref, o_ref):
    """o[n, :] = b[n] + sum_k w[n, k] * x[k, :], batch on the lane axis.

    w_ref: (N, K) f32 in SMEM (12 scalars).
    b_ref: (N,)   f32 in SMEM (4 scalars).
    x_ref: (K, bn) f32 in VMEM, lane-dense over the batch tile.
    o_ref: (N, bn) f32 in VMEM, lane-dense over the batch tile.
    """
    k_dim = x_ref.shape[0]
    n_dim = o_ref.shape[0]

    x = x_ref[...]                                   # (K, bn), resident vregs

    for n in range(n_dim):                           # N = 4 -> static unroll
        # Scalar-splat FMA chain on the VPU; no MXU, no cross-lane broadcasts.
        acc = b_ref[n] + w_ref[n, 0] * x[0:1, :]
        for k in range(1, k_dim):                    # K = 3 -> static unroll
            acc = acc + w_ref[n, k] * x[k:k + 1, :]
        o_ref[n:n + 1, :] = acc.astype(o_ref.dtype)  # lane-dense store


def linear_forward(x, weight, bias, *, lane_tile=65536, pallas_min_batch=256,
                   force_pallas=False):
    """Pallas TPU forward of nn.Linear: y = x @ weight.T + bias.

    Args:
      x:      (B, K) float32 activations.
      weight: (N, K) float32, PyTorch nn.Linear layout (out_features, in_features).
      bias:   (N,)   float32.
      lane_tile: batch tile on the lane axis (multiple of 128).
      pallas_min_batch: below this B, skip Pallas (call overhead > whole op).
      force_pallas: always take the Pallas path (for testing).
    Returns:
      (B, N) float32.
    """
    B, K = x.shape
    N, K_w = weight.shape
    assert K == K_w, "weight in_features must match x feature dim"
    assert lane_tile % 128 == 0, "lane_tile must be a multiple of 128"

    # Small-B fast path: this op is pure HBM streaming (~28 bytes/row, ~0 FLOPs);
    # for tiny B the fixed pallas_call/DMA setup cost exceeds the entire op.
    if B < pallas_min_batch and not force_pallas:
        return x @ weight.T + bias

    # Layout plumbing (outside the kernel): batch onto the lane axis.
    x_t = x.T                                        # (K, B)

    # Lane tile: large multiple of 128 when B is big (unmasked lane-dense
    # stores, >=~1 MiB useful data per step), otherwise the full batch extent
    # in one step (full-array dim -> always legal under the (8,128) rule).
    bn = lane_tile if B >= lane_tile else B
    grid = (pl.cdiv(B, bn),)

    y_t = pl.pallas_call(
        _linear_lane_dense_kernel,
        out_shape=jax.ShapeDtypeStruct((N, B), x.dtype),
        grid_spec=pltpu.PrefetchScalarGridSpec(
            num_scalar_prefetch=0,
            grid=grid,
            in_specs=[
                # weight / bias: a handful of scalars -> SMEM, no VMEM blocks.
                pl.BlockSpec(memory_space=pltpu.MemorySpace.SMEM),
                pl.BlockSpec(memory_space=pltpu.MemorySpace.SMEM),
                # x_t: streamed lane-dense batch tiles.
                pl.BlockSpec((K, bn), lambda i: (0, i)),
            ],
            out_specs=pl.BlockSpec((N, bn), lambda i: (0, i)),
        ),
        compiler_params=pltpu.CompilerParams(
            # Batch tiles are independent -> shard across TensorCores where
            # available.  Padded double-buffered footprint (~8 MiB at the
            # default tile) fits every generation; raise the scoped limit for
            # headroom (v5e default is 16 MiB).
            # TODO(synk): on v7x, also evaluate pltpu.CORE_PARALLEL / core_map
            # to explicitly split the stream across both TensorCores.
            dimension_semantics=("parallel",),
            vmem_limit_bytes=32 * 1024 * 1024,
        ),
        cost_estimate=pl.CostEstimate(
            flops=2 * B * K * N,
            transcendentals=0,
            bytes_accessed=(B * K + B * N + N * K + N) * 4,
        ),
    )(weight, bias, x_t)

    # Layout plumbing back to the PyTorch-facing (B, N) shape.
    return y_t.T


if __name__ == "__main__":
    key = jax.random.PRNGKey(0)
    k_x, k_w, k_b, k_x2 = jax.random.split(key, 4)

    K, N = 3, 4  # nn.Linear(3, 4)

    # Deterministic synthetic parameters, same distribution as torch.nn.Linear
    # init: uniform(-1/sqrt(K), 1/sqrt(K)), weight in torch (out, in) layout.
    bound = 1.0 / math.sqrt(K)
    weight = jax.random.uniform(k_w, (N, K), jnp.float32, -bound, bound)
    bias = jax.random.uniform(k_b, (N,), jnp.float32, -bound, bound)

    # 1) Small batch (the TestNet-style input), forcing the Pallas path so the
    #    kernel itself is exercised (bn = B = full-array extent -> legal block).
    B_small = 8
    x_small = jax.random.normal(k_x, (B_small, K), jnp.float32)
    y_small = jax.block_until_ready(
        linear_forward(x_small, weight, bias, force_pallas=True))
    ref_small = x_small @ weight.T + bias
    assert y_small.shape == (B_small, N)
    assert jnp.allclose(y_small, ref_small, atol=1e-5, rtol=1e-5)

    # 2) Moderate batch exercising the gridded lane-dense path with a partial
    #    (masked) last block: B=300, bn=128 -> grid of 3 steps.
    B_big = 300
    x_big = jax.random.normal(k_x2, (B_big, K), jnp.float32)
    y_big = jax.block_until_ready(
        linear_forward(x_big, weight, bias, lane_tile=128, force_pallas=True))
    ref_big = x_big @ weight.T + bias
    assert y_big.shape == (B_big, N)
    assert jnp.allclose(y_big, ref_big, atol=1e-5, rtol=1e-5)

    # 3) Small-B fast path (no Pallas) still matches.
    y_fast = jax.block_until_ready(linear_forward(x_small, weight, bias))
    assert jnp.allclose(y_fast, ref_small, atol=1e-5, rtol=1e-5)

    print("KERNEL_OK")
</pallas_src>

<mosaic_0001>
module attributes {stable_mosaic.version = 11 : i64} {
  func.func @_linear_lane_dense_kernel(%arg0: i32, %arg1: memref<4x3xf32, #tpu.memory_space<smem>>, %arg2: memref<4xf32, #tpu.memory_space<smem>>, %arg3: memref<3x8xf32, #tpu.memory_space<vmem>>, %arg4: memref<4x8xf32, #tpu.memory_space<vmem>>) attributes {dimension_semantics = [#tpu.dimension_semantics<parallel>], iteration_bounds = array<i64: 1>, scalar_prefetch = 0 : i64, scratch_operands = 0 : i64, tpu.core_type = #tpu.core_type<tc>, window_params = [{transform_indices = @transform_0, window_bounds = array<i64: 4, 3>}, {transform_indices = @transform_1, window_bounds = array<i64: 4>}, {transform_indices = @transform_2, window_bounds = array<i64: 3, 8>}, {transform_indices = @transform_3, window_bounds = array<i64: 4, 8>}]} {
    %c0 = arith.constant 0 : index
    %c0_0 = arith.constant 0 : index
    %0 = vector.load %arg3[%c0, %c0_0] : memref<3x8xf32, #tpu.memory_space<vmem>>, vector<3x8xf32>
    %c0_1 = arith.constant 0 : index
    %1 = memref.load %arg2[%c0_1] : memref<4xf32, #tpu.memory_space<smem>>
    %c0_2 = arith.constant 0 : index
    %c0_3 = arith.constant 0 : index
    %2 = memref.load %arg1[%c0_2, %c0_3] : memref<4x3xf32, #tpu.memory_space<smem>>
    %3 = vector.extract_strided_slice %0 {offsets = [0, 0], sizes = [1, 8], strides = [1, 1]} : vector<3x8xf32> to vector<1x8xf32>
    %4 = vector.broadcast %2 : f32 to vector<1x8xf32>
    %5 = arith.mulf %4, %3 : vector<1x8xf32>
    %6 = vector.broadcast %1 : f32 to vector<1x8xf32>
    %7 = arith.addf %6, %5 : vector<1x8xf32>
    %c0_4 = arith.constant 0 : index
    %c1 = arith.constant 1 : index
    %8 = memref.load %arg1[%c0_4, %c1] : memref<4x3xf32, #tpu.memory_space<smem>>
    %9 = vector.extract_strided_slice %0 {offsets = [1, 0], sizes = [1, 8], strides = [1, 1]} : vector<3x8xf32> to vector<1x8xf32>
    %10 = vector.broadcast %8 : f32 to vector<1x8xf32>
    %11 = arith.mulf %10, %9 : vector<1x8xf32>
    %12 = arith.addf %7, %11 : vector<1x8xf32>
    %c0_5 = arith.constant 0 : index
    %c2 = arith.constant 2 : index
    %13 = memref.load %arg1[%c0_5, %c2] : memref<4x3xf32, #tpu.memory_space<smem>>
    %14 = vector.extract_strided_slice %0 {offsets = [2, 0], sizes = [1, 8], strides = [1, 1]} : vector<3x8xf32> to vector<1x8xf32>
    %15 = vector.broadcast %13 : f32 to vector<1x8xf32>
    %16 = arith.mulf %15, %14 : vector<1x8xf32>
    %17 = arith.addf %12, %16 : vector<1x8xf32>
    %c0_6 = arith.constant 0 : index
    %c0_7 = arith.constant 0 : index
    %18 = vector.load %arg4[%c0_6, %c0_7] : memref<4x8xf32, #tpu.memory_space<vmem>>, vector<1x8xf32>
    tpu.vector_store %arg4[%c0_6, %c0_7], %17 {strides = array<i32>} : memref<4x8xf32, #tpu.memory_space<vmem>>, vector<1x8xf32>,
    %c1_8 = arith.constant 1 : index
    %19 = memref.load %arg2[%c1_8] : memref<4xf32, #tpu.memory_space<smem>>
    %c1_9 = arith.constant 1 : index
    %c0_10 = arith.constant 0 : index
    %20 = memref.load %arg1[%c1_9, %c0_10] : memref<4x3xf32, #tpu.memory_space<smem>>
    %21 = vector.extract_strided_slice %0 {offsets = [0, 0], sizes = [1, 8], strides = [1, 1]} : vector<3x8xf32> to vector<1x8xf32>
    %22 = vector.broadcast %20 : f32 to vector<1x8xf32>
    %23 = arith.mulf %22, %21 : vector<1x8xf32>
    %24 = vector.broadcast %19 : f32 to vector<1x8xf32>
    %25 = arith.addf %24, %23 : vector<1x8xf32>
    %c1_11 = arith.constant 1 : index
    %c1_12 = arith.constant 1 : index
    %26 = memref.load %arg1[%c1_11, %c1_12] : memref<4x3xf32, #tpu.memory_space<smem>>
    %27 = vector.extract_strided_slice %0 {offsets = [1, 0], sizes = [1, 8], strides = [1, 1]} : vector<3x8xf32> to vector<1x8xf32>
    %28 = vector.broadcast %26 : f32 to vector<1x8xf32>
    %29 = arith.mulf %28, %27 : vector<1x8xf32>
    %30 = arith.addf %25, %29 : vector<1x8xf32>
    %c1_13 = arith.constant 1 : index
    %c2_14 = arith.constant 2 : index
    %31 = memref.load %arg1[%c1_13, %c2_14] : memref<4x3xf32, #tpu.memory_space<smem>>
    %32 = vector.extract_strided_slice %0 {offsets = [2, 0], sizes = [1, 8], strides = [1, 1]} : vector<3x8xf32> to vector<1x8xf32>
    %33 = vector.broadcast %31 : f32 to vector<1x8xf32>
    %34 = arith.mulf %33, %32 : vector<1x8xf32>
    %35 = arith.addf %30, %34 : vector<1x8xf32>
    %c1_15 = arith.constant 1 : index
    %c0_16 = arith.constant 0 : index
    %36 = vector.load %arg4[%c1_15, %c0_16] : memref<4x8xf32, #tpu.memory_space<vmem>>, vector<1x8xf32>
    tpu.vector_store %arg4[%c1_15, %c0_16], %35 {strides = array<i32>} : memref<4x8xf32, #tpu.memory_space<vmem>>, vector<1x8xf32>,
    %c2_17 = arith.constant 2 : index
    %37 = memref.load %arg2[%c2_17] : memref<4xf32, #tpu.memory_space<smem>>
    %c2_18 = arith.constant 2 : index
    %c0_19 = arith.constant 0 : index
    %38 = memref.load %arg1[%c2_18, %c0_19] : memref<4x3xf32, #tpu.memory_space<smem>>
    %39 = vector.extract_strided_slice %0 {offsets = [0, 0], sizes = [1, 8], strides = [1, 1]} : vector<3x8xf32> to vector<1x8xf32>
    %40 = vector.broadcast %38 : f32 to vector<1x8xf32>
    %41 = arith.mulf %40, %39 : vector<1x8xf32>
    %42 = vector.broadcast %37 : f32 to vector<1x8xf32>
    %43 = arith.addf %42, %41 : vector<1x8xf32>
    %c2_20 = arith.constant 2 : index
    %c1_21 = arith.constant 1 : index
    %44 = memref.load %arg1[%c2_20, %c1_21] : memref<4x3xf32, #tpu.memory_space<smem>>
    %45 = vector.extract_strided_slice %0 {offsets = [1, 0], sizes = [1, 8], strides = [1, 1]} : vector<3x8xf32> to vector<1x8xf32>
    %46 = vector.broadcast %44 : f32 to vector<1x8xf32>
    %47 = arith.mulf %46, %45 : vector<1x8xf32>
    %48 = arith.addf %43, %47 : vector<1x8xf32>
    %c2_22 = arith.constant 2 : index
    %c2_23 = arith.constant 2 : index
    %49 = memref.load %arg1[%c2_22, %c2_23] : memref<4x3xf32, #tpu.memory_space<smem>>
    %50 = vector.extract_strided_slice %0 {offsets = [2, 0], sizes = [1, 8], strides = [1, 1]} : vector<3x8xf32> to vector<1x8xf32>
    %51 = vector.broadcast %49 : f32 to vector<1x8xf32>
    %52 = arith.mulf %51, %50 : vector<1x8xf32>
    %53 = arith.addf %48, %52 : vector<1x8xf32>
    %c2_24 = arith.constant 2 : index
    %c0_25 = arith.constant 0 : index
    %54 = vector.load %arg4[%c2_24, %c0_25] : memref<4x8xf32, #tpu.memory_space<vmem>>, vector<1x8xf32>
    tpu.vector_store %arg4[%c2_24, %c0_25], %53 {strides = array<i32>} : memref<4x8xf32, #tpu.memory_space<vmem>>, vector<1x8xf32>,
    %c3 = arith.constant 3 : index
    %55 = memref.load %arg2[%c3] : memref<4xf32, #tpu.memory_space<smem>>
    %c3_26 = arith.constant 3 : index
    %c0_27 = arith.constant 0 : index
    %56 = memref.load %arg1[%c3_26, %c0_27] : memref<4x3xf32, #tpu.memory_space<smem>>
    %57 = vector.extract_strided_slice %0 {offsets = [0, 0], sizes = [1, 8], strides = [1, 1]} : vector<3x8xf32> to vector<1x8xf32>
    %58 = vector.broadcast %56 : f32 to vector<1x8xf32>
    %59 = arith.mulf %58, %57 : vector<1x8xf32>
    %60 = vector.broadcast %55 : f32 to vector<1x8xf32>
    %61 = arith.addf %60, %59 : vector<1x8xf32>
    %c3_28 = arith.constant 3 : index
    %c1_29 = arith.constant 1 : index
    %62 = memref.load %arg1[%c3_28, %c1_29] : memref<4x3xf32, #tpu.memory_space<smem>>
    %63 = vector.extract_strided_slice %0 {offsets = [1, 0], sizes = [1, 8], strides = [1, 1]} : vector<3x8xf32> to vector<1x8xf32>
    %64 = vector.broadcast %62 : f32 to vector<1x8xf32>
    %65 = arith.mulf %64, %63 : vector<1x8xf32>
    %66 = arith.addf %61, %65 : vector<1x8xf32>
    %c3_30 = arith.constant 3 : index
    %c2_31 = arith.constant 2 : index
    %67 = memref.load %arg1[%c3_30, %c2_31] : memref<4x3xf32, #tpu.memory_space<smem>>
    %68 = vector.extract_strided_slice %0 {offsets = [2, 0], sizes = [1, 8], strides = [1, 1]} : vector<3x8xf32> to vector<1x8xf32>
    %69 = vector.broadcast %67 : f32 to vector<1x8xf32>
    %70 = arith.mulf %69, %68 : vector<1x8xf32>
    %71 = arith.addf %66, %70 : vector<1x8xf32>
    %c3_32 = arith.constant 3 : index
    %c0_33 = arith.constant 0 : index
    %72 = vector.load %arg4[%c3_32, %c0_33] : memref<4x8xf32, #tpu.memory_space<vmem>>, vector<1x8xf32>
    tpu.vector_store %arg4[%c3_32, %c0_33], %71 {strides = array<i32>} : memref<4x8xf32, #tpu.memory_space<vmem>>, vector<1x8xf32>,
    return
  }
  func.func @transform_0(%arg0: i32) -> (i32, i32) {
    %c0_i32 = arith.constant 0 : i32
    %c0_i32_0 = arith.constant 0 : i32
    %c0_i32_1 = arith.constant 0 : i32
    return %c0_i32, %c0_i32_0 : i32, i32
  }
  func.func @transform_1(%arg0: i32) -> i32 {
    %c0_i32 = arith.constant 0 : i32
    %c0_i32_0 = arith.constant 0 : i32
    return %c0_i32 : i32
  }
  func.func @transform_2(%arg0: i32) -> (i32, i32) {
    %c0_i32 = arith.constant 0 : i32
    %c0_i32_0 = arith.constant 0 : i32
    return %c0_i32, %arg0 : i32, i32
  }
  func.func @transform_3(%arg0: i32) -> (i32, i32) {
    %c0_i32 = arith.constant 0 : i32
    %c0_i32_0 = arith.constant 0 : i32
    return %c0_i32, %arg0 : i32, i32
  }
}

</mosaic_0001>

<llo_original>
// kernel: tpu_custom_call.1
$region0: #{tpu_custom_call.1}
  #allocation0 [shape = 'u32[]', space=smem, size = 0x4, offset = 0x4, fixed_abs, tag = 'smem constant byte address 0x4 - core index']
  #allocation1 [shape = 'u32[144,128]{1,0:T(1,128)}', space=vmem, size = 0x12000, scoped, tag = 'internal scratch']
  %s0 = inlined_call_operand.hbm [shape: f32[4,3], index: 0, kind: input, shape index: {}]
  %s1 = inlined_call_operand.vmem [shape: f32[4], index: 1, kind: input, shape index: {}]
  %s2 = inlined_call_operand.vmem [shape: f32[3,8], index: 2, kind: input, shape index: {}]
  %s3 = inlined_call_operand.hbm [shape: f32[4,8], index: 3, kind: output, shape index: {}]
  %s4 = sld [smem:[#allocation0]]
  $region30: #{tpu_custom_call.1} parent=0
    _
  %s6 = ssub.s32 1, %s4
  %s7 = scalar_select 0, %s6, %s4
  $region1: #{tpu_custom_call.1} parent=0
    #allocation2 [shape = 'u8[2048]{0}', space=smem, size = 0x800, scoped, tag = 'input window, operand 0, single buffered']
    #allocation3 [shape = 's32[1]{0}', space=sflag, size = 0x4, scoped, tag = 'scoped memory for tpu_custom_call.1']
    #allocation4 [shape = 's32[1]{0}', space=sflag, size = 0x4, scoped, tag = 'scoped memory for tpu_custom_call.1']
    #allocation5 [shape = 's32[1]{0}', space=sflag, size = 0x4, scoped, tag = 'scoped memory for tpu_custom_call.1']
    #allocation6 [shape = 'u8[512]{0}', space=smem, size = 0x200, scoped, tag = 'input window, operand 1, single buffered']
    #allocation7 [shape = 'u8[2048]{0}', space=vmem, size = 0x800, scoped, tag = 'output window, operand 0, single buffered']
    %8 = vsyncpa [#allocation4], 0
    %9 = vsyncpa [#allocation5], 0
    %10 = vsyncpa [#allocation3], 0
    // Predicated region
    $region2: #{tpu_custom_call.1} parent=1 // pred_check
      _
    $region3: #{tpu_custom_call.1} parent=1 // pred_check_branch
      %12 = sbr.rel (0) target = $region5
    $region4: #{tpu_custom_call.1} parent=1 // pred_region
      %s14 = ssub.s32 64, 64
      %15 = vsyncadd [#allocation4], %s14
      %18 = dma.hbm_to_smem %s0, 64, [#allocation2], [#allocation4]
    $region5: #{tpu_custom_call.1} parent=1 // pred_fallthru
      _
    // Predicated region
    $region6: #{tpu_custom_call.1} parent=1 // pred_check
      _
    $region7: #{tpu_custom_call.1} parent=1 // pred_check_branch
      %20 = sbr.rel (0) target = $region9
    $region8: #{tpu_custom_call.1} parent=1 // pred_region
      %s22 = ssub.s32 16, 16
      %23 = vsyncadd [#allocation5], %s22
      %s25 = sshll.u32 %s1, 4
      %s26 = int_to_ptr.vmem [resolvable:$true] %s25
      %28 = dma.vmem_to_smem %s26, 16, [#allocation6], [#allocation5]
    $region9: #{tpu_custom_call.1} parent=1 // pred_fallthru
      _
    // Predicated region
    $region10: #{tpu_custom_call.1} parent=1 // pred_check
      _
    $region11: #{tpu_custom_call.1} parent=1 // pred_check_branch
      %30 = sbr.rel (0) target = $region13
    $region12: #{tpu_custom_call.1} parent=1 // pred_region
      _
    $region13: #{tpu_custom_call.1} parent=1 // pred_fallthru
      _
    // Predicated region
    $region14: #{tpu_custom_call.1} parent=1 // pred_check
      _
    $region15: #{tpu_custom_call.1} parent=1 // pred_check_branch
      %32 = sbr.rel (0) target = $region17
    $region16: #{tpu_custom_call.1} parent=1 // pred_region
      %33 = dma.done [#allocation4], 64
    $region17: #{tpu_custom_call.1} parent=1 // pred_fallthru
      _
    // Predicated region
    $region18: #{tpu_custom_call.1} parent=1 // pred_check
      _
    $region19: #{tpu_custom_call.1} parent=1 // pred_check_branch
      %35 = sbr.rel (0) target = $region21
    $region20: #{tpu_custom_call.1} parent=1 // pred_region
      %36 = dma.done [#allocation5], 16
    $region21: #{tpu_custom_call.1} parent=1 // pred_fallthru
      _
    %37 = sfence
    %v38 = vld [vmem:[%s2] sm:$0x7]
    %s39 = sld [smem:[#allocation6]]
    %s40 = sld [smem:[#allocation2]]
    %v41 = vstv %s40
    %v42 = vmul.f32 %v41, %v38
    %v43 = vstv %s39
    %v44 = vadd.f32 %v43, %v42
    %s45 = sld [smem:[#allocation2 + $0x1]]
    %v46 = vstv %s45
    %v47 = vmul.f32 %v46, %v38
    %v49 = vrot.slane %v47, 1
    %v51 = vadd.f32 %v44, %v49
    %s52 = sld [smem:[#allocation2 + $0x2]]
    %v53 = vstv %s52
    %v54 = vmul.f32 %v53, %v38
    %v56 = vrot.slane %v54, 2
    %v58 = vadd.f32 %v51, %v56
    %vm59 = vcmask 57344
    %60 = vst.msk [vmem:[#allocation7] sm:$0x1] %vm59, %v58
    %s61 = sld [smem:[#allocation6 + $0x1]]
    %s62 = sld [smem:[#allocation2 + $0x80]]
    %v63 = vstv %s62
    %v64 = vmul.f32 %v63, %v38
    %v65 = vstv %s61
    %v66 = vadd.f32 %v65, %v64
    %s67 = sld [smem:[#allocation2 + $0x81]]
    %v68 = vstv %s67
    %v69 = vmul.f32 %v68, %v38
    %v71 = vrot.slane %v69, 1
    %v73 = vadd.f32 %v66, %v71
    %s74 = sld [smem:[#allocation2 + $0x82]]
    %v75 = vstv %s74
    %v76 = vmul.f32 %v75, %v38
    %v78 = vrot.slane %v76, 2
    %v80 = vadd.f32 %v73, %v78
    %81 = vst.msk [vmem:[#allocation7 + $0x1] sm:$0x1] %vm59, %v80
    %s82 = sld [smem:[#allocation6 + $0x2]]
    %s83 = sld [smem:[#allocation2 + $0x100]]
    %v84 = vstv %s83
    %v85 = vmul.f32 %v84, %v38
    %v86 = vstv %s82
    %v87 = vadd.f32 %v86, %v85
    %s88 = sld [smem:[#allocation2 + $0x101]]
    %v89 = vstv %s88
    %v90 = vmul.f32 %v89, %v38
    %v92 = vrot.slane %v90, 1
    %v94 = vadd.f32 %v87, %v92
    %s95 = sld [smem:[#allocation2 + $0x102]]
    %v96 = vstv %s95
    %v97 = vmul.f32 %v96, %v38
    %v99 = vrot.slane %v97, 2
    %v101 = vadd.f32 %v94, %v99
    %102 = vst.msk [vmem:[#allocation7 + $0x2] sm:$0x1] %vm59, %v101
    %s103 = sld [smem:[#allocation6 + $0x3]]
    %s104 = sld [smem:[#allocation2 + $0x180]]
    %v105 = vstv %s104
    %v106 = vmul.f32 %v105, %v38
    %v107 = vstv %s103
    %v108 = vadd.f32 %v107, %v106
    %s109 = sld [smem:[#allocation2 + $0x181]]
    %v110 = vstv %s109
    %v111 = vmul.f32 %v110, %v38
    %v113 = vrot.slane %v111, 1
    %v115 = vadd.f32 %v108, %v113
    %s116 = sld [smem:[#allocation2 + $0x182]]
    %v117 = vstv %s116
    %v118 = vmul.f32 %v117, %v38
    %v120 = vrot.slane %v118, 2
    %v122 = vadd.f32 %v115, %v120
    %123 = vst.msk [vmem:[#allocation7 + $0x3] sm:$0x1] %vm59, %v122
    // Predicated region
    $region22: #{tpu_custom_call.1} parent=1 // pred_check
      _
    $region23: #{tpu_custom_call.1} parent=1 // pred_check_branch
      %125 = sbr.rel (0) target = $region25
    $region24: #{tpu_custom_call.1} parent=1 // pred_region
      %s127 = ssub.s32 64, 64
      %128 = vsyncadd [#allocation3], %s127
      %s130 = sshll.u32 [#allocation7], 4
      %s131 = int_to_ptr.vmem [resolvable:$true] %s130
      %133 = dma.vmem_to_hbm [thread:$0]  %s131, 64, %s3, [#allocation3]
    $region25: #{tpu_custom_call.1} parent=1 // pred_fallthru
      _
    // Predicated region
    $region26: #{tpu_custom_call.1} parent=1 // pred_check
      _
    $region27: #{tpu_custom_call.1} parent=1 // pred_check_branch
      %135 = sbr.rel (0) target = $region29
    $region28: #{tpu_custom_call.1} parent=1 // pred_region
      %136 = dma.done [#allocation3], 64
    $region29: #{tpu_custom_call.1} parent=1 // pred_fallthru
      _
    %137 = vsyncpa [#allocation3], 1
    %138 = vsyncpa [#allocation4], 1
    %139 = vsyncpa [#allocation5], 1

</llo_original>
